<compile_context>
chip_gen: v7x
topology: tpu7x:2x2x1
jax: 0.10.0
libtpu: 0.0.40
codegen_flags: <defaults>
</compile_context>

<pallas_src>
import functools
import math

import jax
import jax.numpy as jnp
from jax.experimental import pallas as pl
from jax.experimental.pallas import tpu as pltpu

_LANE = 128
_SUBLANE = 8
_CHUNK = 128          # points (lanes) handled per inner-loop iteration
_REFRESH = 4          # recompute exact sin/cos every _REFRESH bands


def _round_up(a, b):
    return (a + b - 1) // b * b


def _pe_kernel(x_ref, o_ref, *, freqs, include_input, log_sampling, freq_last):
    """x_ref: (C, tile_n) lane-dense input block.  o_ref: (tile_n, D_out) block."""
    C, tile_n = x_ref.shape
    F = len(freqs)
    n_blocks = 2 * F + (1 if include_input else 0)
    D_out = n_blocks * C
    R = _round_up(D_out, _SUBLANE)                 # 8-sublane aligned staging rows
    n_chunks = tile_n // _CHUNK
    step = (freqs[1] - freqs[0]) if F > 1 else 0.0
    need_step = (not log_sampling) and any(k % _REFRESH != 0 for k in range(F))

    def chunk_body(j, carry):
        col0 = pl.multiple_of(j * _CHUNK, _CHUNK)
        x = x_ref[:, pl.ds(col0, _CHUNK)].astype(jnp.float32)     # (C, CHUNK)

        sins, coss = [], []
        if need_step:
            d = step * x
            sd, cd = jnp.sin(d), jnp.cos(d)
        s = c = None
        for k in range(F):
            if k % _REFRESH == 0:
                a = freqs[k] * x
                s, c = jnp.sin(a), jnp.cos(a)                      # exact (EUP/VPU)
            elif log_sampling:
                # f_k = 2 * f_{k-1}: double-angle recurrence (pure VPU)
                s, c = 2.0 * s * c, 1.0 - 2.0 * s * s
            else:
                # f_k = f_{k-1} + step: angle-addition recurrence (pure VPU)
                s, c = s * cd + c * sd, c * cd - s * sd
            sins.append(s)
            coss.append(c)

        # Staging rows in exactly the output-column order.  freq_last is free
        # here: it is only a different static row ordering.
        rows = []
        if freq_last:
            for ch in range(C):
                if include_input:
                    rows.append(x[ch:ch + 1, :])
                rows.extend(p[ch:ch + 1, :] for p in sins)
                rows.extend(p[ch:ch + 1, :] for p in coss)
        else:
            if include_input:
                rows.append(x)
            rows.extend(sins)
            rows.extend(coss)
        if R > D_out:
            rows.append(jnp.zeros((R - D_out, _CHUNK), jnp.float32))
        buf = jnp.concatenate(rows, axis=0)                        # (R, CHUNK)

        # Aligned (R, 128) -> (128, R) transpose on the XLU, then one aligned
        # full-width store into the natural (points, features) output block.
        t = jnp.transpose(buf)                                     # (CHUNK, R)
        o_ref[pl.ds(col0, _CHUNK), :] = t[:, :D_out].astype(o_ref.dtype)
        return carry

    jax.lax.fori_loop(0, n_chunks, chunk_body, 0, unroll=(n_chunks <= 8))


def positional_encoding(x, N_freqs=4, include_input=True, log_sampling=True,
                        angular_enc=False, pi_bands=False, freq_last=False,
                        block_cols=8192, vmem_budget_bytes=20 * 1024 * 1024,
                        out_dtype=None):
    """Pallas TPU implementation of accelRF PositionalEncoding.forward.

    x: (..., C) float array.  Returns (..., (2*N_freqs + int(include_input)) * C).
    out_dtype: optional narrower store dtype (e.g. jnp.bfloat16); compute stays f32.
    """
    orig_shape = x.shape
    C = orig_shape[-1]
    N = math.prod(orig_shape[:-1])
    out_dtype = x.dtype if out_dtype is None else jnp.dtype(out_dtype)

    # frequency bands in pure Python (static at trace time)
    if log_sampling:
        freqs = [2.0 ** i for i in range(N_freqs)]
    else:
        lo, hi = 1.0, 2.0 ** (N_freqs - 1)
        if N_freqs == 1:
            freqs = [lo]
        else:
            freqs = [lo + (hi - lo) * i / (N_freqs - 1) for i in range(N_freqs)]
    if pi_bands:
        freqs = [f * math.pi for f in freqs]
    freqs = tuple(freqs)

    n_blocks = 2 * N_freqs + (1 if include_input else 0)
    D_out = n_blocks * C

    x2 = x.reshape(N, C)
    if angular_enc:
        # TODO(synk): arccos has no verified in-kernel Mosaic lowering; done here
        # (one tiny input-sized pass) to keep kernel compilation robust.
        x2 = jnp.arccos(jnp.clip(x2, -1.0 + 1e-6, 1.0 - 1e-6))
    # lane-dense layout for the kernel: N on the lane axis (12N-byte relayout,
    # vs the 108N-byte output which is now written in its final layout).
    xT = x2.T                                            # (C, N)

    # ---- tile selection: multiple of 128 lanes, layout-aware VMEM cap,
    # ---- >=4 grid steps for large N (both v7x TensorCores get >=2 blocks).
    out_itemsize = jnp.dtype(out_dtype).itemsize
    bytes_per_pt = 2 * (_round_up(C, _SUBLANE) * 4
                        + _round_up(D_out, _LANE) * out_itemsize)   # dbl-buffered in+out
    max_tile = max(_LANE, (vmem_budget_bytes // bytes_per_pt) // _LANE * _LANE)
    n_ceil = _round_up(max(N, 1), _LANE)
    tile_n = min(max(_LANE, _round_up(block_cols, _LANE)), max_tile, n_ceil)
    if n_ceil // tile_n < 4 and n_ceil >= 4 * 1024:
        tile_n = max(1024, _round_up(pl.cdiv(n_ceil, 4), _LANE))
    grid = pl.cdiv(N, tile_n)

    in_block_bytes = _round_up(C, _SUBLANE) * tile_n * 4
    out_block_bytes = tile_n * _round_up(D_out, _LANE) * out_itemsize
    vmem_limit = int(min(max(2 * (in_block_bytes + out_block_bytes) + 4 * 1024 * 1024,
                             16 * 1024 * 1024), 32 * 1024 * 1024))

    kernel = functools.partial(
        _pe_kernel, freqs=freqs, include_input=bool(include_input),
        log_sampling=bool(log_sampling), freq_last=bool(freq_last))

    out = pl.pallas_call(
        kernel,
        out_shape=jax.ShapeDtypeStruct((N, D_out), out_dtype),
        grid_spec=pltpu.PrefetchScalarGridSpec(
            num_scalar_prefetch=0,
            grid=(grid,),
            in_specs=[pl.BlockSpec((C, tile_n), lambda i: (0, i))],
            out_specs=pl.BlockSpec((tile_n, D_out), lambda i: (i, 0)),
        ),
        compiler_params=pltpu.CompilerParams(
            dimension_semantics=("parallel",),
            vmem_limit_bytes=vmem_limit),
    )(xT)

    return out.reshape(*orig_shape[:-1], D_out)


def positional_encoding_ref(x, N_freqs=4, include_input=True, log_sampling=True,
                            angular_enc=False, pi_bands=False, freq_last=False):
    # pure-JAX reference mirroring the PyTorch forward
    if log_sampling:
        freq_bands = 2.0 ** jnp.linspace(0.0, N_freqs - 1, N_freqs)
    else:
        freq_bands = jnp.linspace(2.0 ** 0.0, 2.0 ** (N_freqs - 1), N_freqs)
    if pi_bands:
        freq_bands = freq_bands * math.pi
    half_pi = math.pi / 2.0
    if angular_enc:
        x = jnp.arccos(jnp.clip(x, -1.0 + 1e-6, 1.0 - 1e-6))
    fx = jnp.einsum('...c,f->...fc', x, freq_bands)
    embed = jnp.sin(jnp.concatenate([fx, fx + half_pi], axis=-2))
    if include_input:
        embed = jnp.concatenate([x[..., None, :], embed], axis=-2)
    if freq_last:
        embed = jnp.swapaxes(embed, -1, -2)
    return embed.reshape(*embed.shape[:-2], -1)


if __name__ == "__main__":
    key = jax.random.PRNGKey(0)
    # typical NeRF point input: (rays, samples_per_ray, 3)
    x = jax.random.uniform(key, (2, 64, 3), dtype=jnp.float32, minval=-1.0, maxval=1.0)

    out = positional_encoding(x)                       # N_freqs=4, include_input=True
    out = jax.block_until_ready(out)
    ref = positional_encoding_ref(x)
    assert out.shape == (2, 64, 27), out.shape
    assert jnp.allclose(out, ref, atol=2e-5, rtol=2e-5)

    # ragged N (185 points -> one partial block), non-log bands (angle-addition
    # recurrence), pi_bands, include_input=False, in-kernel freq_last ordering.
    x2 = jax.random.uniform(jax.random.PRNGKey(1), (5, 37, 3), dtype=jnp.float32,
                            minval=-1.0, maxval=1.0)
    cfg = dict(N_freqs=3, include_input=False, log_sampling=False,
               pi_bands=True, freq_last=True)
    out2 = jax.block_until_ready(positional_encoding(x2, **cfg))
    ref2 = positional_encoding_ref(x2, **cfg)
    assert out2.shape == (5, 37, 18), out2.shape
    assert jnp.allclose(out2, ref2, atol=2e-5, rtol=2e-5)

    # multi-step grid + rolled inner chunk loop + partial last block.
    x3 = jax.random.uniform(jax.random.PRNGKey(2), (4, 700, 3), dtype=jnp.float32,
                            minval=-1.0, maxval=1.0)
    out3 = jax.block_until_ready(positional_encoding(x3, block_cols=1024))
    ref3 = positional_encoding_ref(x3)
    assert out3.shape == (4, 700, 27), out3.shape
    assert jnp.allclose(out3, ref3, atol=2e-5, rtol=2e-5)

    print("KERNEL_OK")
</pallas_src>

<mosaic_0001>
module attributes {stable_mosaic.version = 11 : i64} {
  func.func @_pe_kernel(%arg0: i32, %arg1: memref<3x128xf32, #tpu.memory_space<vmem>>, %arg2: memref<128x27xf32, #tpu.memory_space<vmem>>) attributes {dimension_semantics = [#tpu.dimension_semantics<parallel>], iteration_bounds = array<i64: 1>, scalar_prefetch = 0 : i64, scratch_operands = 0 : i64, tpu.core_type = #tpu.core_type<tc>, window_params = [{transform_indices = @transform_0, window_bounds = array<i64: 3, 128>}, {transform_indices = @transform_1, window_bounds = array<i64: 128, 27>}]} {
    %c0_i32 = arith.constant 0 : i32
    %c128_i32 = arith.constant 128 : i32
    %0 = arith.muli %c0_i32, %c128_i32 : i32
    %1 = tpu.assume_multiple %0, 128 : i32
    %c0 = arith.constant 0 : index
    %2 = arith.index_cast %1 : i32 to index
    %3 = vector.load %arg1[%c0, %2] : memref<3x128xf32, #tpu.memory_space<vmem>>, vector<3x128xf32>
    %cst = arith.constant 1.000000e+00 : f32
    %4 = vector.broadcast %cst : f32 to vector<3x128xf32>
    %5 = arith.mulf %4, %3 : vector<3x128xf32>
    %6 = math.sin %5 : vector<3x128xf32>
    %7 = math.cos %5 : vector<3x128xf32>
    %cst_0 = arith.constant 2.000000e+00 : f32
    %8 = vector.broadcast %cst_0 : f32 to vector<3x128xf32>
    %9 = arith.mulf %8, %6 : vector<3x128xf32>
    %10 = arith.mulf %9, %7 : vector<3x128xf32>
    %cst_1 = arith.constant 2.000000e+00 : f32
    %11 = vector.broadcast %cst_1 : f32 to vector<3x128xf32>
    %12 = arith.mulf %11, %6 : vector<3x128xf32>
    %13 = arith.mulf %12, %6 : vector<3x128xf32>
    %cst_2 = arith.constant 1.000000e+00 : f32
    %14 = vector.broadcast %cst_2 : f32 to vector<3x128xf32>
    %15 = arith.subf %14, %13 : vector<3x128xf32>
    %cst_3 = arith.constant 2.000000e+00 : f32
    %16 = vector.broadcast %cst_3 : f32 to vector<3x128xf32>
    %17 = arith.mulf %16, %10 : vector<3x128xf32>
    %18 = arith.mulf %17, %15 : vector<3x128xf32>
    %cst_4 = arith.constant 2.000000e+00 : f32
    %19 = vector.broadcast %cst_4 : f32 to vector<3x128xf32>
    %20 = arith.mulf %19, %10 : vector<3x128xf32>
    %21 = arith.mulf %20, %10 : vector<3x128xf32>
    %cst_5 = arith.constant 1.000000e+00 : f32
    %22 = vector.broadcast %cst_5 : f32 to vector<3x128xf32>
    %23 = arith.subf %22, %21 : vector<3x128xf32>
    %cst_6 = arith.constant 2.000000e+00 : f32
    %24 = vector.broadcast %cst_6 : f32 to vector<3x128xf32>
    %25 = arith.mulf %24, %18 : vector<3x128xf32>
    %26 = arith.mulf %25, %23 : vector<3x128xf32>
    %cst_7 = arith.constant 2.000000e+00 : f32
    %27 = vector.broadcast %cst_7 : f32 to vector<3x128xf32>
    %28 = arith.mulf %27, %18 : vector<3x128xf32>
    %29 = arith.mulf %28, %18 : vector<3x128xf32>
    %cst_8 = arith.constant 1.000000e+00 : f32
    %30 = vector.broadcast %cst_8 : f32 to vector<3x128xf32>
    %31 = arith.subf %30, %29 : vector<3x128xf32>
    %cst_9 = arith.constant 0.000000e+00 : f32
    %32 = vector.broadcast %cst_9 : f32 to vector<5x128xf32>
    %33 = tpu.concatenate %3, %6, %10, %18, %26, %7, %15, %23, %31, %32 in 0 : vector<3x128xf32>, vector<3x128xf32>, vector<3x128xf32>, vector<3x128xf32>, vector<3x128xf32>, vector<3x128xf32>, vector<3x128xf32>, vector<3x128xf32>, vector<3x128xf32>, vector<5x128xf32> -> vector<32x128xf32>
    %34 = tpu.transpose %33, [1, 0] : vector<32x128xf32> -> vector<128x32xf32>
    %35 = vector.extract_strided_slice %34 {offsets = [0, 0], sizes = [128, 27], strides = [1, 1]} : vector<128x32xf32> to vector<128x27xf32>
    %36 = arith.index_cast %1 : i32 to index
    %c0_10 = arith.constant 0 : index
    %37 = vector.load %arg2[%36, %c0_10] : memref<128x27xf32, #tpu.memory_space<vmem>>, vector<128x27xf32>
    tpu.vector_store %arg2[%36, %c0_10], %35 {strides = array<i32>} : memref<128x27xf32, #tpu.memory_space<vmem>>, vector<128x27xf32>,
    %c1_i32 = arith.constant 1 : i32
    return
  }
  func.func @transform_0(%arg0: i32) -> (i32, i32) {
    %c0_i32 = arith.constant 0 : i32
    %c0_i32_0 = arith.constant 0 : i32
    return %c0_i32, %arg0 : i32, i32
  }
  func.func @transform_1(%arg0: i32) -> (i32, i32) {
    %c0_i32 = arith.constant 0 : i32
    %c0_i32_0 = arith.constant 0 : i32
    return %arg0, %c0_i32 : i32, i32
  }
}

</mosaic_0001>

<llo_original>
// kernel: tpu_custom_call.1
$region0: #{tpu_custom_call.1}
  #allocation0 [shape = 'u32[]', space=smem, size = 0x4, offset = 0x4, fixed_abs, tag = 'smem constant byte address 0x4 - core index']
  #allocation1 [shape = 'u32[144,128]{1,0:T(1,128)}', space=vmem, size = 0x12000, scoped, tag = 'internal scratch']
  %s0 = inlined_call_operand.hbm [shape: f32[3,128], index: 0, kind: input, shape index: {}]
  %s1 = inlined_call_operand.vmem [shape: f32[128,27], index: 1, kind: output, shape index: {}]
  %s2 = sld [smem:[#allocation0]]
  $region18: #{tpu_custom_call.1} parent=0
    _
  %s4 = ssub.s32 1, %s2
  %s5 = scalar_select 0, %s4, %s2
  $region1: #{tpu_custom_call.1} parent=0
    #allocation2 [shape = 'u8[2048]{0}', space=vmem, size = 0x800, scoped, tag = 'input window, operand 0, single buffered']
    #allocation3 [shape = 's32[1]{0}', space=sflag, size = 0x4, scoped, tag = 'scoped memory for tpu_custom_call.1']
    %6 = vsyncpa [#allocation3], 0
    // Predicated region
    $region2: #{tpu_custom_call.1} parent=1 // pred_check
      _
    $region3: #{tpu_custom_call.1} parent=1 // pred_check_branch
      %8 = sbr.rel (0) target = $region5
    $region4: #{tpu_custom_call.1} parent=1 // pred_region
      %s10 = ssub.s32 64, 64
      %11 = vsyncadd [#allocation3], %s10
      %s13 = sshll.u32 [#allocation2], 4
      %s14 = int_to_ptr.vmem [resolvable:$true] %s13
      %16 = dma.hbm_to_vmem [thread:$0]  %s0, 64, %s14, [#allocation3]
    $region5: #{tpu_custom_call.1} parent=1 // pred_fallthru
      _
    // Predicated region
    $region6: #{tpu_custom_call.1} parent=1 // pred_check
      _
    $region7: #{tpu_custom_call.1} parent=1 // pred_check_branch
      %18 = sbr.rel (0) target = $region9
    $region8: #{tpu_custom_call.1} parent=1 // pred_region
      %19 = dma.done [#allocation3], 64
    $region9: #{tpu_custom_call.1} parent=1 // pred_fallthru
      _
    %v20 = vld [vmem:[#allocation2] sm:$0x7]
    %v21 = vand.u32 2147483647, %v20
    %vm22 = vcmp.le.f32.partialorder %v21, 0.7853982
    %vm23 = vcmp.lt.s32.totalorder %v20, 0
    %v24 = vand.u32 %v20, 2139095040
    %v25 = vshrl.u32 %v24, 23
    %v26 = vsub.s32 %v25, 127
    %v27 = vand.u32 2147483647, %v20
    %v28 = vand.u32 %v27, 8388607
    %v29 = vor.u32 %v28, 8388608
    %v30 = vsub.s32 0, %v29
    %v31 = vadd.s32 %v26, 1
    %vm32 = vcmp.gt.s32.totalorder %v31, 0
    %v33 = vsel %vm32, %v31, 0
    %v34 = vshrl.u32 %v33, 5
    %v35 = vand.u32 %v33, 31
    %v36 = vsub.s32 32, %v35
    %v37 = vshrl.u32 683565275, %v36
    %v38 = vshll.u32 683565275, %v35
    %v39 = vshrl.u32 2475754826, %v36
    %v40 = vor.u32 %v38, %v39
    %v41 = vshll.u32 2475754826, %v35
    %v42 = vshrl.u32 2131351028, %v36
    %v43 = vor.u32 %v41, %v42
    %v44 = vshll.u32 2131351028, %v35
    %v45 = vshrl.u32 2102212464, %v36
    %v46 = vor.u32 %v44, %v45
    %v47 = vshll.u32 2102212464, %v35
    %v48 = vshrl.u32 920167782, %v36
    %v49 = vor.u32 %v47, %v48
    %v50 = vshll.u32 920167782, %v35
    %v51 = vshrl.u32 1326507024, %v36
    %v52 = vor.u32 %v50, %v51
    %vm53 = vcmp.lt.s32.totalorder %v34, 1
    %vm54 = vcmp.lt.s32.totalorder %v34, 2
    %vm55 = vcmp.lt.s32.totalorder %v34, 3
    %vm56 = vcmp.lt.s32.totalorder %v34, 4
    %v57 = vsel %vm53, %v37, %v40
    %v58 = vsel %vm56, %v46, 2102212464
    %v59 = vsel %vm55, %v43, %v58
    %v60 = vsel %vm54, %v57, %v59
    %v61 = vsel %vm53, %v40, %v43
    %v62 = vsel %vm56, %v49, 920167782
    %v63 = vsel %vm55, %v46, %v62
    %v64 = vsel %vm54, %v61, %v63
    %v65 = vsel %vm53, %v43, %v46
    %v66 = vsel %vm56, %v52, 1326507024
    %v67 = vsel %vm55, %v49, %v66
    %v68 = vsel %vm54, %v65, %v67
    %v69 = vshll.u32 %v29, 8
    %v70 = vmul.u32.u64.compose %v69, %v68
    %v71 = vextract.low.u32 %v70
    %v72 = vextract.high.u32 %v70
    %v73 = vmul.u32.u64.compose %v69, %v64
    %v74 = vextract.low.u32 %v73
    %v75 = vextract.high.u32 %v73
    %v76 = vmul.u32 %v69, %v60
    %v77 = vadd.s32 %v72, %v74
    %vm78 = vc.u32 %v72, %v74
    %v79 = vadd.s32 %v75, 1
    %v80 = vsel %vm78, %v79, %v75
    %v81 = vadd.s32 %v76, %v80
    %v82 = vadd.s32 %v81, 536870912
    %v83 = vshrl.u32 %v82, 30
    %v84 = vshll.u32 %v83, 30
    %v85 = vsub.s32 %v81, %v84
    %vm86 = vcmp.lt.s32.totalorder %v85, 0
    %v87 = vsub.s32 0, %v85
    %v88 = vsel %vm86, %v87, %v85
    %v89 = vclz %v88
    %v90 = vsub.s32 %v89, 2
    %vm91 = vcmp.gt.s32.totalorder 0, %v90
    %v92 = vsel %vm91, 0, %v90
    %v93 = vsub.s32 32, %v92
    %v94 = vshll.u32 %v85, %v92
    %v95 = vshrl.u32 %v77, %v93
    %v96 = vor.u32 %v94, %v95
    %v97 = vsub.s32 4294967266, %v92
    %v98 = vadd.s32 %v97, 127
    %v99 = vshll.u32 %v98, 23
    %v100 = vor.u32 4788187, %v99
    %v101 = vand.u32 2147483647, %v100
    %v103 = vcvt.s32.f32 %v96
    %v104 = vmul.f32 %v103, %v101
    %v105 = vxor.u32 %v104, 2147483648
    %v106 = vsel %vm23, %v105, %v104
    %v107 = vsub.s32 4, %v83
    %v108 = vsel %vm23, %v107, %v83
    %v109 = vsel %vm22, %v20, %v106
    %v110 = vsel %vm22, 0, %v108
    %v111 = vcosq.f32.pop %v109
    %v112 = vsinq.f32.pop %v109
    %vm113 = vweird.f32 %v20
    %v114 = vadd.s32 %v110, 3
    %v115 = vand.u32 %v114, 3
    %vm116 = vcmp.lt.s32.totalorder %v115, 2
    %vm117 = vcmp.eq.s32.totalorder %v115, 0
    %v118 = vxor.u32 %v112, 2147483648
    %v119 = vsel %vm117, %v111, %v118
    %vm120 = vcmp.eq.s32.totalorder %v115, 2
    %v121 = vxor.u32 %v111, 2147483648
    %v122 = vsel %vm120, %v121, %v112
    %v123 = vsel %vm116, %v119, %v122
    %v124 = vsel %vm113, nan, %v123
    %v125 = vand.u32 2147483647, %v20
    %vm126 = vcmp.le.f32.partialorder %v125, 0.7853982
    %vm127 = vcmp.lt.s32.totalorder %v20, 0
    %v128 = vand.u32 %v20, 2139095040
    %v129 = vshrl.u32 %v128, 23
    %v130 = vsub.s32 %v129, 127
    %v131 = vand.u32 2147483647, %v20
    %v132 = vand.u32 %v131, 8388607
    %v133 = vor.u32 %v132, 8388608
    %v134 = vsub.s32 0, %v133
    %v135 = vadd.s32 %v130, 1
    %vm136 = vcmp.gt.s32.totalorder %v135, 0
    %v137 = vsel %vm136, %v135, 0
    %v138 = vshrl.u32 %v137, 5
    %v139 = vand.u32 %v137, 31
    %v140 = vsub.s32 32, %v139
    %v141 = vshrl.u32 683565275, %v140
    %v142 = vshll.u32 683565275, %v139
    %v143 = vshrl.u32 2475754826, %v140
    %v144 = vor.u32 %v142, %v143
    %v145 = vshll.u32 2475754826, %v139
    %v146 = vshrl.u32 2131351028, %v140
    %v147 = vor.u32 %v145, %v146
    %v148 = vshll.u32 2131351028, %v139
    %v149 = vshrl.u32 2102212464, %v140
    %v150 = vor.u32 %v148, %v149
    %v151 = vshll.u32 2102212464, %v139
    %v152 = vshrl.u32 920167782, %v140
    %v153 = vor.u32 %v151, %v152
    %v154 = vshll.u32 920167782, %v139
    %v155 = vshrl.u32 1326507024, %v140
    %v156 = vor.u32 %v154, %v155
    %vm157 = vcmp.lt.s32.totalorder %v138, 1
    %vm158 = vcmp.lt.s32.totalorder %v138, 2
    %vm159 = vcmp.lt.s32.totalorder %v138, 3
    %vm160 = vcmp.lt.s32.totalorder %v138, 4
    %v161 = vsel %vm157, %v141, %v144
    %v162 = vsel %vm160, %v150, 2102212464
    %v163 = vsel %vm159, %v147, %v162
    %v164 = vsel %vm158, %v161, %v163
    %v165 = vsel %vm157, %v144, %v147
    %v166 = vsel %vm160, %v153, 920167782
    %v167 = vsel %vm159, %v150, %v166
    %v168 = vsel %vm158, %v165, %v167
    %v169 = vsel %vm157, %v147, %v150
    %v170 = vsel %vm160, %v156, 1326507024
    %v171 = vsel %vm159, %v153, %v170
    %v172 = vsel %vm158, %v169, %v171
    %v173 = vshll.u32 %v133, 8
    %v174 = vmul.u32.u64.compose %v173, %v172
    %v175 = vextract.low.u32 %v174
    %v176 = vextract.high.u32 %v174
    %v177 = vmul.u32.u64.compose %v173, %v168
    %v178 = vextract.low.u32 %v177
    %v179 = vextract.high.u32 %v177
    %v180 = vmul.u32 %v173, %v164
    %v181 = vadd.s32 %v176, %v178
    %vm182 = vc.u32 %v176, %v178
    %v183 = vadd.s32 %v179, 1
    %v184 = vsel %vm182, %v183, %v179
    %v185 = vadd.s32 %v180, %v184
    %v186 = vadd.s32 %v185, 536870912
    %v187 = vshrl.u32 %v186, 30
    %v188 = vshll.u32 %v187, 30
    %v189 = vsub.s32 %v185, %v188
    %vm190 = vcmp.lt.s32.totalorder %v189, 0
    %v191 = vsub.s32 0, %v189
    %v192 = vsel %vm190, %v191, %v189
    %v193 = vclz %v192
    %v194 = vsub.s32 %v193, 2
    %vm195 = vcmp.gt.s32.totalorder 0, %v194
    %v196 = vsel %vm195, 0, %v194
    %v197 = vsub.s32 32, %v196
    %v198 = vshll.u32 %v189, %v196
    %v199 = vshrl.u32 %v181, %v197
    %v200 = vor.u32 %v198, %v199
    %v201 = vsub.s32 4294967266, %v196
    %v202 = vadd.s32 %v201, 127
    %v203 = vshll.u32 %v202, 23
    %v204 = vor.u32 4788187, %v203
    %v205 = vand.u32 2147483647, %v204
    %v207 = vcvt.s32.f32 %v200
    %v208 = vmul.f32 %v207, %v205
    %v209 = vxor.u32 %v208, 2147483648
    %v210 = vsel %vm127, %v209, %v208
    %v211 = vsub.s32 4, %v187
    %v212 = vsel %vm127, %v211, %v187
    %v213 = vsel %vm126, %v20, %v210
    %v214 = vsel %vm126, 0, %v212
    %v215 = vcosq.f32.pop %v213
    %v216 = vsinq.f32.pop %v213
    %vm217 = vweird.f32 %v20
    %v218 = vand.u32 %v214, 3
    %vm219 = vcmp.lt.s32.totalorder %v218, 2
    %vm220 = vcmp.eq.s32.totalorder %v218, 0
    %v221 = vxor.u32 %v216, 2147483648
    %v222 = vsel %vm220, %v215, %v221
    %vm223 = vcmp.eq.s32.totalorder %v218, 2
    %v224 = vxor.u32 %v215, 2147483648
    %v225 = vsel %vm223, %v224, %v216
    %v226 = vsel %vm219, %v222, %v225
    %v227 = vsel %vm217, nan, %v226
    %v228 = vmul.f32 %v124, 2.0
    %v229 = vmul.f32 %v228, %v227
    %v230 = vmul.f32 %v228, %v124
    %v231 = vsub.f32 1.0, %v230
    %v232 = vmul.f32 %v229, 2.0
    %v233 = vmul.f32 %v232, %v231
    %v234 = vmul.f32 %v232, %v229
    %v235 = vsub.f32 1.0, %v234
    %v236 = vmul.f32 %v233, 2.0
    %v237 = vmul.f32 %v236, %v235
    %v238 = vmul.f32 %v236, %v233
    %v239 = vsub.f32 1.0, %v238
    %v241 = vrot.slane %v124, 5
    %v244 = vrot.slane %v229, 2
    %v247 = vrot.slane %v233, 7
    %v250 = vrot.slane %v237, 4
    %v253 = vrot.slane %v227, 1
    %v256 = vrot.slane %v231, 6
    %v259 = vrot.slane %v235, 3
    %vm261 = vcmask 1042432
    %v262 = vsel %vm261, %v20, %v241
    %vm263 = vcmask 1045504
    %v264 = vsel %vm263, %v262, %v244
    %vm265 = vcmask 1040384
    %v266 = vsel %vm265, %v244, %v247
    %vm267 = vcmask 1043456
    %v268 = vsel %vm267, %v266, %v250
    %vm269 = vcmask 1046528
    %v270 = vsel %vm269, %v268, %v253
    %vm271 = vcmask 1041408
    %v272 = vsel %vm271, %v253, %v256
    %vm273 = vcmask 1044480
    %v274 = vsel %vm273, %v272, %v259
    %v275 = vsel %vm261, %v239, 0.0
    %276 = vxpose.xlu0.b32.start [1/16] %v264, 128
    %277 = vxpose.xlu0.b32.cont [2/16] %v270, 128
    %278 = vxpose.xlu0.b32.cont [3/16] %v274, 128
    %279 = vxpose.xlu0.b32.cont [4/16] %v275, 128
    %280 = vxpose.xlu0.b32.cont [5/16] 0.0, 128
    %281 = vxpose.xlu0.b32.cont [6/16] 0.0, 128
    %282 = vxpose.xlu0.b32.cont [7/16] 0.0, 128
    %283 = vxpose.xlu0.b32.cont [8/16] 0.0, 128
    %284 = vxpose.xlu0.b32.cont [9/16] 0.0, 128
    %285 = vxpose.xlu0.b32.cont [10/16] 0.0, 128
    %286 = vxpose.xlu0.b32.cont [11/16] 0.0, 128
    %287 = vxpose.xlu0.b32.cont [12/16] 0.0, 128
    %288 = vxpose.xlu0.b32.cont [13/16] 0.0, 128
    %289 = vxpose.xlu0.b32.cont [14/16] 0.0, 128
    %290 = vxpose.xlu0.b32.cont [15/16] 0.0, 128
    %291 = vxpose.xlu0.b32.end [16/16] 0.0, 128
    %v292 = vpop.trf.xlu0
    %v293 = vpop.trf.xlu0
    %v294 = vpop.trf.xlu0
    %v295 = vpop.trf.xlu0
    %v296 = vpop.trf.xlu0
    %v297 = vpop.trf.xlu0
    %v298 = vpop.trf.xlu0
    %v299 = vpop.trf.xlu0
    %v300 = vpop.trf.xlu0
    %v301 = vpop.trf.xlu0
    %v302 = vpop.trf.xlu0
    %v303 = vpop.trf.xlu0
    %v304 = vpop.trf.xlu0
    %v305 = vpop.trf.xlu0
    %v306 = vpop.trf.xlu0
    %v307 = vpop.trf.xlu0
    %vm308 = vcmask 220160
    %309 = vst.msk [vmem:[%s1] sm:$0xff] %vm308, %v292
    %310 = vst.msk [vmem:[%s1 + $0x8] sm:$0xff] %vm308, %v293
    %311 = vst.msk [vmem:[%s1 + $0x10] sm:$0xff] %vm308, %v294
    %312 = vst.msk [vmem:[%s1 + $0x18] sm:$0xff] %vm308, %v295
    %313 = vst.msk [vmem:[%s1 + $0x20] sm:$0xff] %vm308, %v296
    %314 = vst.msk [vmem:[%s1 + $0x28] sm:$0xff] %vm308, %v297
    %315 = vst.msk [vmem:[%s1 + $0x30] sm:$0xff] %vm308, %v298
    %316 = vst.msk [vmem:[%s1 + $0x38] sm:$0xff] %vm308, %v299
    %317 = vst.msk [vmem:[%s1 + $0x40] sm:$0xff] %vm308, %v300
    %318 = vst.msk [vmem:[%s1 + $0x48] sm:$0xff] %vm308, %v301
    %319 = vst.msk [vmem:[%s1 + $0x50] sm:$0xff] %vm308, %v302
    %320 = vst.msk [vmem:[%s1 + $0x58] sm:$0xff] %vm308, %v303
    %321 = vst.msk [vmem:[%s1 + $0x60] sm:$0xff] %vm308, %v304
    %322 = vst.msk [vmem:[%s1 + $0x68] sm:$0xff] %vm308, %v305
    %323 = vst.msk [vmem:[%s1 + $0x70] sm:$0xff] %vm308, %v306
    %324 = vst.msk [vmem:[%s1 + $0x78] sm:$0xff] %vm308, %v307
    // Predicated region
    $region10: #{tpu_custom_call.1} parent=1 // pred_check
      _
    $region11: #{tpu_custom_call.1} parent=1 // pred_check_branch
      %326 = sbr.rel (0) target = $region13
    $region12: #{tpu_custom_call.1} parent=1 // pred_region
      _
    $region13: #{tpu_custom_call.1} parent=1 // pred_fallthru
      _
    // Predicated region
    $region14: #{tpu_custom_call.1} parent=1 // pred_check
      _
    $region15: #{tpu_custom_call.1} parent=1 // pred_check_branch
      %328 = sbr.rel (0) target = $region17
    $region16: #{tpu_custom_call.1} parent=1 // pred_region
      _
    $region17: #{tpu_custom_call.1} parent=1 // pred_fallthru
      _
    %329 = vsyncpa [#allocation3], 1

</llo_original>
